<compile_context>
chip_gen: v5e
topology: v5e:2x2
jax: 0.10.0
libtpu: 0.0.40
codegen_flags: <defaults>
</compile_context>

<pallas_src>
import jax
import jax.numpy as jnp
from jax.experimental import pallas as pl
from jax.experimental.pallas import tpu as pltpu


def _tp5_kernel(p_ref, o_ref):
    p = p_ref[...]
    # Match the reference expression/association exactly: p * ((0.5151 + p) + (-0.3706))
    o_ref[...] = p * (0.5151 + p + -0.3706)


def _vmem_capacity_bytes():
    try:
        info = pltpu.get_tpu_info()
        cap = int(getattr(info, "vmem_capacity_bytes", 0) or 0)
        if cap > 0:
            return cap
    except Exception:
        pass
    return 64 << 20  # conservative fallback: assume v7x (smallest per-TC VMEM)


_VMEM_CAP = _vmem_capacity_bytes()
# Explicit scoped-VMEM limit (deterministic across chips): 3/4 of physical, <= 96 MiB.
#   v5e/v6e (128 MiB physical) -> 96 MiB ;  v7x (64 MiB) -> 48 MiB.
_VMEM_LIMIT = min(_VMEM_CAP * 3 // 4, 96 << 20)
# ~8 MiB blocks => 4 * 8 MiB = 32 MiB resident for double-buffered in+out,
# leaving headroom for Mosaic internal scratch under the explicit limit.
_TARGET_BYTES = min(8 << 20, _VMEM_LIMIT // 6)


def _run_bulk(p2, rows, lanes, dtype, itemsize, sub_mult):
    """Run the elementwise kernel over a (rows, lanes) slab."""
    # Block rows from the VMEM budget, rounded to a sublane multiple.
    tile_rows = max(sub_mult,
                    (_TARGET_BYTES // (lanes * itemsize)) // sub_mult * sub_mult)
    # Keep >= ~8 grid steps when the tensor is big enough: preserves DMA/compute
    # overlap and lets both v7x TensorCores take grid steps.
    min_steps = 8
    desired = -(-rows // min_steps)                       # cdiv(rows, min_steps)
    desired = max(sub_mult, -(-desired // sub_mult) * sub_mult)
    tile_rows = min(tile_rows, desired)
    if tile_rows >= rows:
        tile_rows = rows                                  # tiny slab: one full-extent block
    grid = (pl.cdiv(rows, tile_rows),)                    # partial last block is masked

    n_bulk = rows * lanes
    return pl.pallas_call(
        _tp5_kernel,
        out_shape=jax.ShapeDtypeStruct((rows, lanes), dtype),
        grid_spec=pltpu.PrefetchScalarGridSpec(
            num_scalar_prefetch=0,
            grid=grid,
            in_specs=[pl.BlockSpec((tile_rows, lanes), lambda i: (i, 0))],
            out_specs=pl.BlockSpec((tile_rows, lanes), lambda i: (i, 0)),
        ),
        # NOTE: if the caller can donate p, adding input_output_aliases={0: 0}
        # would halve the HBM footprint; omitted here since the demo reuses x.
        compiler_params=pltpu.CompilerParams(
            dimension_semantics=("parallel",),            # TODO(synk): verify dual-TC on v7x; else pltpu.CORE_PARALLEL
            vmem_limit_bytes=_VMEM_LIMIT,
        ),
        cost_estimate=pl.CostEstimate(
            flops=3 * n_bulk,                             # 2 adds + 1 mul per element
            transcendentals=0,
            bytes_accessed=2 * n_bulk * itemsize,
        ),
    )(p2)


@jax.jit
def tp5_forward(p):
    """Elementwise: p * (0.5151 + p + -0.3706), any shape."""
    orig_shape = p.shape
    dtype = p.dtype
    n = int(p.size)
    if n == 0:                                            # empty-tensor guard
        return p

    itemsize = jnp.dtype(dtype).itemsize
    sub_mult = max(8, 32 // itemsize)                     # 8 f32, 16 bf16, 32 int8/fp8
    flat = p.reshape(-1)

    lanes = 0
    for cand in (1024, 512, 256, 128):                    # widest lane-dense width that divides n
        if n % cand == 0:
            lanes = cand
            break

    if lanes:
        rows = n // lanes
        out_flat = _run_bulk(flat.reshape(rows, lanes), rows, lanes,
                             dtype, itemsize, sub_mult).reshape(-1)
    elif n >= 128:
        # Non-multiple of 128: kernel on the 128-aligned bulk, plain-jnp tail (<128 elems).
        lanes = 128
        rows = n // lanes
        bulk = rows * lanes
        out_bulk = _run_bulk(flat[:bulk].reshape(rows, lanes), rows, lanes,
                             dtype, itemsize, sub_mult).reshape(-1)
        t = flat[bulk:]
        out_tail = t * (0.5151 + t + -0.3706)
        out_flat = jnp.concatenate([out_bulk, out_tail])
    else:
        # Tiny (<128 elements): a kernel launch is pure overhead.
        out_flat = flat * (0.5151 + flat + -0.3706)

    return out_flat.reshape(orig_shape)


if __name__ == "__main__":
    key = jax.random.PRNGKey(0)
    # Tp_5(m, l) takes m, l but never uses them in forward; no parameters.
    x = jax.random.normal(key, (2, 4, 16, 16), dtype=jnp.float32)

    y = tp5_forward(x)
    jax.block_until_ready(y)

    # Reference check in plain JAX (same association as the PyTorch module).
    y_ref = x * (0.5151 + x + -0.3706)
    assert y.shape == x.shape and y.dtype == x.dtype
    assert jnp.allclose(y, y_ref, atol=1e-6, rtol=1e-6)
    print("KERNEL_OK")
</pallas_src>

<mosaic_0001>
module attributes {stable_mosaic.version = 11 : i64} {
  func.func @_tp5_kernel(%arg0: i32, %arg1: memref<2x1024xf32, #tpu.memory_space<vmem>>, %arg2: memref<2x1024xf32, #tpu.memory_space<vmem>>) attributes {dimension_semantics = [#tpu.dimension_semantics<parallel>], iteration_bounds = array<i64: 1>, scalar_prefetch = 0 : i64, scratch_operands = 0 : i64, tpu.core_type = #tpu.core_type<tc>, window_params = [{transform_indices = @transform_0, window_bounds = array<i64: 2, 1024>}, {transform_indices = @transform_1, window_bounds = array<i64: 2, 1024>}]} {
    %c0 = arith.constant 0 : index
    %c0_0 = arith.constant 0 : index
    %0 = vector.load %arg1[%c0, %c0_0] : memref<2x1024xf32, #tpu.memory_space<vmem>>, vector<2x1024xf32>
    %cst = arith.constant 5.151000e-01 : f32
    %1 = vector.broadcast %cst : f32 to vector<2x1024xf32>
    %2 = arith.addf %1, %0 : vector<2x1024xf32>
    %cst_1 = arith.constant -3.706000e-01 : f32
    %3 = vector.broadcast %cst_1 : f32 to vector<2x1024xf32>
    %4 = arith.addf %2, %3 : vector<2x1024xf32>
    %5 = arith.mulf %0, %4 : vector<2x1024xf32>
    %c0_2 = arith.constant 0 : index
    %c0_3 = arith.constant 0 : index
    %6 = vector.load %arg2[%c0_2, %c0_3] : memref<2x1024xf32, #tpu.memory_space<vmem>>, vector<2x1024xf32>
    tpu.vector_store %arg2[%c0_2, %c0_3], %5 {strides = array<i32>} : memref<2x1024xf32, #tpu.memory_space<vmem>>, vector<2x1024xf32>,
    return
  }
  func.func @transform_0(%arg0: i32) -> (i32, i32) {
    %c0_i32 = arith.constant 0 : i32
    %c0_i32_0 = arith.constant 0 : i32
    return %arg0, %c0_i32 : i32, i32
  }
  func.func @transform_1(%arg0: i32) -> (i32, i32) {
    %c0_i32 = arith.constant 0 : i32
    %c0_i32_0 = arith.constant 0 : i32
    return %arg0, %c0_i32 : i32, i32
  }
}

</mosaic_0001>

<llo_original>
// kernel: tp5_forward.1
$region0: #{tp5_forward.1}
  #allocation0 [shape = 'u32[]', space=smem, size = 0x4, offset = 0x4, fixed_abs, tag = 'smem constant byte address 0x4 - core index']
  #allocation1 [shape = 'u32[72,128]{1,0:T(1,128)}', space=vmem, size = 0x9000, scoped, tag = 'internal scratch']
  %s0 = inlined_call_operand.vmem [shape: f32[2,1024], index: 0, kind: input, shape index: {}]
  %s1 = inlined_call_operand.vmem [shape: f32[2,1024], index: 1, kind: output, shape index: {}]
  %s2 = sld [smem:[#allocation0]]
  $region14: #{tp5_forward.1} parent=0
    _
  %s4 = ssub.s32 1, %s2
  %s5 = scalar_select 0, %s4, %s2
  // Predicated region
  $region2: #{tp5_forward.1} parent=0 // pred_check
    _
  $region3: #{tp5_forward.1} parent=0 // pred_check_branch
    %7 = sbr.rel (0) target = $region5
  $region4: #{tp5_forward.1} parent=0 // pred_region
    _
  $region5: #{tp5_forward.1} parent=0 // pred_fallthru
    _
  %v8 = vld [vmem:[%s0] sm:$0xff]
  %v9 = vld [vmem:[%s0 + $0x8] sm:$0xff]
  %v10 = vadd.f32 %v8, 0.5151
  %v11 = vadd.f32 %v9, 0.5151
  %v12 = vadd.f32 %v10, -0.3706
  %v13 = vadd.f32 %v11, -0.3706
  %v14 = vmul.f32 %v8, %v12
  %v15 = vmul.f32 %v9, %v13
  %16 = vst [vmem:[%s1] sm:$0xff] %v14
  %17 = vst [vmem:[%s1 + $0x8] sm:$0xff] %v15
  // Predicated region
  $region6: #{tp5_forward.1} parent=0 // pred_check
    _
  $region7: #{tp5_forward.1} parent=0 // pred_check_branch
    %19 = sbr.rel (0) target = $region9
  $region8: #{tp5_forward.1} parent=0 // pred_region
    _
  $region9: #{tp5_forward.1} parent=0 // pred_fallthru
    _
  // Predicated region
  $region10: #{tp5_forward.1} parent=0 // pred_check
    _
  $region11: #{tp5_forward.1} parent=0 // pred_check_branch
    %21 = sbr.rel (0) target = $region13
  $region12: #{tp5_forward.1} parent=0 // pred_region
    _
  $region13: #{tp5_forward.1} parent=0 // pred_fallthru
    _

</llo_original>
